<compile_context>
chip_gen: v5e
topology: v5e:2x2
jax: 0.10.0
libtpu: 0.0.40
codegen_flags: <defaults>
</compile_context>

<pallas_src>
import functools

import jax
import jax.numpy as jnp
from jax import lax
from jax.experimental import pallas as pl
from jax.experimental.pallas import tpu as pltpu


def _round_up(x, m):
    return ((x + m - 1) // m) * m


def _sublane(dtype):
    # sublane packing granularity for dense (T, D) tiles
    return {4: 8, 2: 16, 1: 32}.get(jnp.dtype(dtype).itemsize, 8)


def _vmem_capacity_bytes():
    """Per-TensorCore physical VMEM, generation aware (64 MiB v7x, 128 MiB v5e/v6e)."""
    try:
        return int(pltpu.get_tpu_info().vmem_capacity_bytes)
    except Exception:
        try:
            kind = jax.devices()[0].device_kind.lower()
        except Exception:
            kind = ""
        return (64 << 20) if "v7" in kind else (128 << 20)


def _is_v5e():
    try:
        kind = jax.devices()[0].device_kind.lower()
    except Exception:
        return False
    return ("v5 lite" in kind) or ("v5e" in kind) or ("v5lite" in kind)


# --------------------------------------------------------------------------
# Fast path: whole table resident in VMEM; gather = chunked one-hot matmul
# (MXU, exact for finite rows).  The vocab-chunking keeps the (T, Vc) one-hot
# intermediate small instead of materializing a full (T, V) iota.
# --------------------------------------------------------------------------
def _embed_onehot_kernel(overwrite_fct, v_chunk, n_chunks, ids_ref, tbl_ref, out_ref):
    # ids_ref: (T, 1) int32   tbl_ref: (Vp, Dp) resident   out_ref: (T, Dp)
    ids = ids_ref[...]                                            # (T, 1)
    T, Dp = out_ref.shape

    if n_chunks == 1:
        iota = lax.broadcasted_iota(jnp.int32, (T, v_chunk), 1)   # (T, Vp)
        onehot = (ids == iota).astype(tbl_ref.dtype)
        rows = jnp.dot(onehot, tbl_ref[...],
                       preferred_element_type=jnp.float32)        # (T, Dp) f32
    else:
        def body(c, acc):
            start = pl.multiple_of(c * v_chunk, v_chunk)
            iota = c * v_chunk + lax.broadcasted_iota(jnp.int32, (T, v_chunk), 1)
            onehot = (ids == iota).astype(tbl_ref.dtype)          # (T, Vc)
            return acc + jnp.dot(onehot, tbl_ref[pl.ds(start, v_chunk), :],
                                 preferred_element_type=jnp.float32)
        rows = lax.fori_loop(0, n_chunks, body, jnp.zeros((T, Dp), jnp.float32))

    if overwrite_fct is not None:
        rows = overwrite_fct(rows)
    out_ref[...] = rows.astype(out_ref.dtype)


def _embed_fast(flat_ids, table_p, overwrite_fct, T, v_chunk, n_chunks, vmem_limit):
    Vp, Dp = table_p.shape
    n_tok = flat_ids.shape[0]
    n_pad = _round_up(n_tok, T)
    n_tiles = n_pad // T
    ids = jnp.pad(flat_ids, (0, n_pad - n_tok)).reshape(n_pad, 1)

    kernel = functools.partial(_embed_onehot_kernel, overwrite_fct, v_chunk, n_chunks)

    def build(table_spec):
        return pl.pallas_call(
            kernel,
            out_shape=jax.ShapeDtypeStruct((n_pad, Dp), table_p.dtype),
            grid_spec=pltpu.PrefetchScalarGridSpec(
                num_scalar_prefetch=0,
                grid=(n_tiles,),
                in_specs=[pl.BlockSpec((T, 1), lambda i: (i, 0)),   # token-id tile
                          table_spec],                              # whole table, resident
                out_specs=pl.BlockSpec((T, Dp), lambda i: (i, 0)),
            ),
            compiler_params=pltpu.CompilerParams(
                dimension_semantics=("parallel",),
                vmem_limit_bytes=vmem_limit,
            ),
        )

    # The table is grid-invariant (index_map -> (0, 0)); request single buffering so it
    # occupies 1x (not 2x) of VMEM.  Fall back to default pipelining if the installed
    # jax rejects pipeline_mode / Buffered(1).
    try:
        single_buf = pl.BlockSpec((Vp, Dp), lambda i: (0, 0),
                                  pipeline_mode=pl.Buffered(1))
        out = build(single_buf)(ids, table_p)
    except Exception:
        out = build(pl.BlockSpec((Vp, Dp), lambda i: (0, 0)))(ids, table_p)
    return out[:n_tok]


# --------------------------------------------------------------------------
# Fallback path (large vocab): table stays in HBM; ids are scalar-prefetched
# into SMEM; per-row DMAs gather T rows/tile into a double-buffered VMEM slab,
# with tile i+1's gathers issued before tile i is drained (cross-step overlap).
# NOTE: sub-KiB per-row copies are DMA-descriptor-overhead bound; the resident
# fast path is preferred whenever the table fits the VMEM budget.
# --------------------------------------------------------------------------
def _embed_dma_kernel(overwrite_fct, T, ids_ref, tbl_hbm, out_ref, rows, sems):
    # ids_ref: (n_pad,) int32 SMEM    tbl_hbm: (V, Dp) HBM
    # out_ref: (T, Dp)                rows: (2, T, Dp) VMEM    sems: (2, T) DMA sems
    i = pl.program_id(0)
    n = pl.num_programs(0)
    slot = i % 2

    def issue(tile, slot_):
        base = tile * T

        @pl.loop(0, T)
        def _(t):
            idx = ids_ref[base + t]
            pltpu.make_async_copy(tbl_hbm.at[pl.ds(idx, 1)],
                                  rows.at[slot_, pl.ds(t, 1)],
                                  sems.at[slot_, t]).start()

    # Prime the pipeline on the very first step.
    @pl.when(i == 0)
    def _():
        issue(0, 0)

    # Prefetch the NEXT tile's rows into the other slot before draining this one.
    @pl.when(i + 1 < n)
    def _():
        issue(i + 1, 1 - slot)

    # Drain this tile's gathers (reconstruct the exact same descriptors).
    base_i = i * T

    @pl.loop(0, T)
    def _(t):
        idx = ids_ref[base_i + t]
        pltpu.make_async_copy(tbl_hbm.at[pl.ds(idx, 1)],
                              rows.at[slot, pl.ds(t, 1)],
                              sems.at[slot, t]).wait()

    e = rows[slot]                                       # (T, Dp)
    if overwrite_fct is not None:
        e = overwrite_fct(e.astype(jnp.float32))
    out_ref[...] = e.astype(out_ref.dtype)


def _embed_dma(flat_ids, table_p, overwrite_fct, T):
    Vp, Dp = table_p.shape
    n_tok = flat_ids.shape[0]
    n_pad = _round_up(n_tok, T)
    n_tiles = n_pad // T
    ids = jnp.pad(flat_ids, (0, n_pad - n_tok))          # pad with id 0 (valid, discarded)
    # TODO(synk): for very large token counts, stage per-tile ids instead of
    # scalar-prefetching the whole id array into SMEM (SMEM pads to next pow2).

    kernel = functools.partial(_embed_dma_kernel, overwrite_fct, T)
    out = pl.pallas_call(
        kernel,
        out_shape=jax.ShapeDtypeStruct((n_pad, Dp), table_p.dtype),
        grid_spec=pltpu.PrefetchScalarGridSpec(
            num_scalar_prefetch=1,                        # ids land in SMEM
            grid=(n_tiles,),
            in_specs=[pl.BlockSpec(memory_space=pl.ANY)],  # table stays in HBM
            out_specs=pl.BlockSpec((T, Dp), lambda i, ids: (i, 0)),
            scratch_shapes=[
                pltpu.VMEM((2, T, Dp), table_p.dtype),    # double-buffered gather slab
                pltpu.SemaphoreType.DMA((2, T)),
            ],
        ),
        compiler_params=pltpu.CompilerParams(
            # Cross-step prefetch carries state in the `rows` scratch => the token axis
            # must run sequentially.
            # TODO(synk): split tiles across the 2 TensorCores on v7x via pl.core_map.
            dimension_semantics=("arbitrary",),
        ),
    )(ids, table_p)
    return out[:n_tok]


# --------------------------------------------------------------------------
# Wrapper == OverwriteableEmbedding.forward
# --------------------------------------------------------------------------
def overwriteable_embedding(indices, table, overwrite_fct=None, *,
                            vmem_table_budget_bytes=None,
                            max_resident_vocab=None):
    """indices: (...,) int token ids; table: (V, D); returns indices.shape + (D,).
    overwrite_fct must be a jnp-traceable elementwise function; it is applied in-kernel
    in float32 (both paths) and cast back to table.dtype (like nn.Embedding's output
    dtype).  Out-of-range ids are clamped instead of raising."""
    V, D = table.shape
    flat = jnp.clip(indices.reshape(-1).astype(jnp.int32), 0, V - 1)
    n_tok = flat.shape[0]
    itemsize = jnp.dtype(table.dtype).itemsize
    sub = _sublane(table.dtype)

    # Lane-dense output tiles: pad the embedding dim to a multiple of 128 so stores
    # lower to full (unmasked) vst instead of vst.msk.
    Dp = _round_up(D, 128)
    table_p = table if Dp == D else jnp.pad(table, ((0, 0), (0, Dp - D)))

    vmem_cap = _vmem_capacity_bytes()
    if vmem_table_budget_bytes is None:
        # Table may end up double-buffered by the pipeline -> keep 2x table well under
        # the per-TensorCore VMEM.
        vmem_table_budget_bytes = min(vmem_cap // 3, 48 << 20)
    if max_resident_vocab is None:
        # The one-hot/MXU gather costs O(T*V*D) flops; on v5e's slower (multi-pass f32)
        # MXU cap the resident vocab harder so the HBM gather wins earlier.
        max_resident_vocab = 1024 if (_is_v5e() and itemsize >= 4) else 4096

    table_bytes = V * Dp * itemsize
    use_fast = (table_bytes <= vmem_table_budget_bytes) and (V <= max_resident_vocab)

    if use_fast:
        # fast-path sizing
        if V <= 768:
            v_chunk = _round_up(V, sub)
            Vp, n_chunks = v_chunk, 1
        else:
            v_chunk = 512
            Vp = _round_up(V, v_chunk)
            n_chunks = Vp // v_chunk
        T = max(sub, min(256, _round_up(min(n_tok, 256), sub)))
        needed = (2 * Vp * Dp * itemsize       # resident table (worst case: double-buffered)
                  + 4 * T * Dp * itemsize      # double-buffered output tiles (+slack)
                  + T * Dp * 4                 # f32 accumulator
                  + 2 * T * v_chunk * 4        # one-hot chunk intermediates
                  + (4 << 20))                 # compiler margin
        if needed <= vmem_cap - (8 << 20):
            tbl_fast = table_p if Vp == V else jnp.pad(table_p, ((0, Vp - V), (0, 0)))
            # Always set the limit explicitly (v5e's scoped default is only 16 MiB).
            vmem_limit = int(min(max(needed, 16 << 20), vmem_cap - (4 << 20)))
            out_flat = _embed_fast(flat, tbl_fast, overwrite_fct, T,
                                   v_chunk, n_chunks, vmem_limit)
        else:
            use_fast = False   # too big for this generation's VMEM -> HBM gather

    if not use_fast:
        # fallback sizing: 2x rows slab + 2x out tiles + f32 temp fits the default
        # scoped-VMEM budget on every generation (incl. v5e's 16 MiB).
        per_tok = (4 * itemsize + 4) * Dp
        cap_mem = max(sub, (((8 << 20) // per_tok) // sub) * sub)
        T = max(sub, min(256, cap_mem, _round_up(min(n_tok, 256), sub)))
        out_flat = _embed_dma(flat, table_p, overwrite_fct, T)

    if Dp != D:
        out_flat = out_flat[:, :D]
    return out_flat.reshape(indices.shape + (D,))


if __name__ == "__main__":
    key = jax.random.PRNGKey(0)
    k_tbl, k_ids, k_ids2 = jax.random.split(key, 3)

    V, D = 32, 128       # vocab size, embedding dim
    table = jax.random.normal(k_tbl, (V, D), dtype=jnp.float32)
    overwrite_fct = lambda e: 2.0 * e + 1.0

    # Small shapes matching the module's forward (batch=2, seq=8), plus a larger token
    # count that exercises multi-tile grids and the cross-step DMA prefetch.
    idx_small = jax.random.randint(k_ids, (2, 8), 0, V, dtype=jnp.int32)
    idx_big = jax.random.randint(k_ids2, (2, 160), 0, V, dtype=jnp.int32)

    for idx in (idx_small, idx_big):
        ref = overwrite_fct(table[idx])

        # Fast path (table resident in VMEM).
        out_fast = jax.block_until_ready(overwriteable_embedding(idx, table, overwrite_fct))
        assert out_fast.shape == idx.shape + (D,), out_fast.shape
        assert jnp.allclose(out_fast, ref, atol=1e-5, rtol=1e-5), "fast path mismatch"

        # Fallback path (force the manual-DMA gather by shrinking the VMEM table budget).
        out_dma = jax.block_until_ready(
            overwriteable_embedding(idx, table, overwrite_fct, vmem_table_budget_bytes=0))
        assert jnp.allclose(out_dma, ref, atol=1e-5, rtol=1e-5), "DMA path mismatch"

    # overwrite_fct=None case (plain embedding lookup).
    out_plain = jax.block_until_ready(overwriteable_embedding(idx_small, table, None))
    assert jnp.allclose(out_plain, table[idx_small], atol=1e-5, rtol=1e-5), "plain lookup mismatch"

    print("KERNEL_OK")
</pallas_src>

<mosaic_0001>
module attributes {stable_mosaic.version = 11 : i64} {
  func.func @_embed_onehot_kernel(%arg0: i32, %arg1: memref<16x1xi32, #tpu.memory_space<vmem>>, %arg2: memref<32x128xf32, #tpu.memory_space<vmem>>, %arg3: memref<16x128xf32, #tpu.memory_space<vmem>>) attributes {dimension_semantics = [#tpu.dimension_semantics<parallel>], iteration_bounds = array<i64: 1>, scalar_prefetch = 0 : i64, scratch_operands = 0 : i64, tpu.core_type = #tpu.core_type<tc>, window_params = [{transform_indices = @transform_0, window_bounds = array<i64: 16, 1>}, {pipeline_mode = #tpu.pipeline_mode<synchronous>, transform_indices = @transform_1, window_bounds = array<i64: 32, 128>}, {transform_indices = @transform_2, window_bounds = array<i64: 16, 128>}]} {
    %c0 = arith.constant 0 : index
    %c0_0 = arith.constant 0 : index
    %0 = vector.load %arg1[%c0, %c0_0] : memref<16x1xi32, #tpu.memory_space<vmem>>, vector<16x1xi32>
    %1 = tpu.iota {dimensions = array<i32: 1>} : vector<16x32xi32>
    %2 = vector.broadcast %0 : vector<16x1xi32> to vector<16x32xi32>
    %3 = arith.cmpi eq, %2, %1 : vector<16x32xi32>
    %4 = arith.extui %3 : vector<16x32xi1> to vector<16x32xi32>
    %5 = arith.sitofp %4 : vector<16x32xi32> to vector<16x32xf32>
    %c0_1 = arith.constant 0 : index
    %c0_2 = arith.constant 0 : index
    %6 = vector.load %arg2[%c0_1, %c0_2] : memref<32x128xf32, #tpu.memory_space<vmem>>, vector<32x128xf32>
    %cst = arith.constant dense<0.000000e+00> : vector<16x128xf32>
    %7 = tpu.matmul %5, %6, %cst {dimension_numbers = #tpu.dot_dimension_numbers<[1], [0], [0], [1], [0, 0, 1, 1], [], []>} : vector<16x32xf32>, vector<32x128xf32>, vector<16x128xf32> -> vector<16x128xf32>
    %cst_3 = arith.constant 2.000000e+00 : f32
    %8 = vector.broadcast %cst_3 : f32 to vector<16x128xf32>
    %9 = arith.mulf %8, %7 : vector<16x128xf32>
    %cst_4 = arith.constant 1.000000e+00 : f32
    %10 = vector.broadcast %cst_4 : f32 to vector<16x128xf32>
    %11 = arith.addf %9, %10 : vector<16x128xf32>
    %c0_5 = arith.constant 0 : index
    %c0_6 = arith.constant 0 : index
    %12 = vector.load %arg3[%c0_5, %c0_6] : memref<16x128xf32, #tpu.memory_space<vmem>>, vector<16x128xf32>
    tpu.vector_store %arg3[%c0_5, %c0_6], %11 {strides = array<i32>} : memref<16x128xf32, #tpu.memory_space<vmem>>, vector<16x128xf32>,
    return
  }
  func.func @transform_0(%arg0: i32) -> (i32, i32) {
    %c0_i32 = arith.constant 0 : i32
    %c0_i32_0 = arith.constant 0 : i32
    return %arg0, %c0_i32 : i32, i32
  }
  func.func @transform_1(%arg0: i32) -> (i32, i32) {
    %c0_i32 = arith.constant 0 : i32
    %c0_i32_0 = arith.constant 0 : i32
    %c0_i32_1 = arith.constant 0 : i32
    return %c0_i32, %c0_i32_0 : i32, i32
  }
  func.func @transform_2(%arg0: i32) -> (i32, i32) {
    %c0_i32 = arith.constant 0 : i32
    %c0_i32_0 = arith.constant 0 : i32
    return %arg0, %c0_i32 : i32, i32
  }
}

module attributes {stable_mosaic.version = 11 : i64} {
  func.func @_embed_onehot_kernel(%arg0: i32, %arg1: memref<16x1xi32, #tpu.memory_space<vmem>>, %arg2: memref<32x128xf32, #tpu.memory_space<vmem>>, %arg3: memref<16x128xf32, #tpu.memory_space<vmem>>) attributes {dimension_semantics = [#tpu.dimension_semantics<parallel>], iteration_bounds = array<i64: 1>, scalar_prefetch = 0 : i64, scratch_operands = 0 : i64, tpu.core_type = #tpu.core_type<tc>, window_params = [{transform_indices = @transform_0, window_bounds = array<i64: 16, 1>}, {pipeline_mode = #tpu.pipeline_mode<synchronous>, transform_indices = @transform_1, window_bounds = array<i64: 32, 128>}, {transform_indices = @transform_2, window_bounds = array<i64: 16, 128>}]} {
    %c0 = arith.constant 0 : index
    %c0_0 = arith.constant 0 : index
    %0 = vector.load %arg1[%c0, %c0_0] : memref<16x1xi32, #tpu.memory_space<vmem>>, vector<16x1xi32>
    %1 = tpu.iota {dimensions = array<i32: 1>} : vector<16x32xi32>
    %2 = vector.broadcast %0 : vector<16x1xi32> to vector<16x32xi32>
    %3 = arith.cmpi eq, %2, %1 : vector<16x32xi32>
    %4 = arith.extui %3 : vector<16x32xi1> to vector<16x32xi32>
    %5 = arith.sitofp %4 : vector<16x32xi32> to vector<16x32xf32>
    %c0_1 = arith.constant 0 : index
    %c0_2 = arith.constant 0 : index
    %6 = vector.load %arg2[%c0_1, %c0_2] : memref<32x128xf32, #tpu.memory_space<vmem>>, vector<32x128xf32>
    %cst = arith.constant dense<0.000000e+00> : vector<16x128xf32>
    %7 = tpu.matmul %5, %6, %cst {dimension_numbers = #tpu.dot_dimension_numbers<[1], [0], [0], [1], [0, 0, 1, 1], [], []>} : vector<16x32xf32>, vector<32x128xf32>, vector<16x128xf32> -> vector<16x128xf32>
    %cst_3 = arith.constant 2.000000e+00 : f32
    %8 = vector.broadcast %cst_3 : f32 to vector<16x128xf32>
    %9 = arith.mulf %8, %7 : vector<16x128xf32>
    %cst_4 = arith.constant 1.000000e+00 : f32
    %10 = vector.broadcast %cst_4 : f32 to vector<16x128xf32>
    %11 = arith.addf %9, %10 : vector<16x128xf32>
    %c0_5 = arith.constant 0 : index
    %c0_6 = arith.constant 0 : index
    %12 = vector.load %arg3[%c0_5, %c0_6] : memref<16x128xf32, #tpu.memory_space<vmem>>, vector<16x128xf32>
    tpu.vector_store %arg3[%c0_5, %c0_6], %11 {strides = array<i32>} : memref<16x128xf32, #tpu.memory_space<vmem>>, vector<16x128xf32>,
    return
  }
  func.func @transform_0(%arg0: i32) -> (i32, i32) {
    %c0_i32 = arith.constant 0 : i32
    %c0_i32_0 = arith.constant 0 : i32
    return %arg0, %c0_i32 : i32, i32
  }
  func.func @transform_1(%arg0: i32) -> (i32, i32) {
    %c0_i32 = arith.constant 0 : i32
    %c0_i32_0 = arith.constant 0 : i32
    %c0_i32_1 = arith.constant 0 : i32
    return %c0_i32, %c0_i32_0 : i32, i32
  }
  func.func @transform_2(%arg0: i32) -> (i32, i32) {
    %c0_i32 = arith.constant 0 : i32
    %c0_i32_0 = arith.constant 0 : i32
    return %arg0, %c0_i32 : i32, i32
  }
}

</mosaic_0001>

<llo_original>
// kernel: tpu_custom_call.1
$region0: #{tpu_custom_call.1}
  #allocation0 [shape = 'u32[]', space=smem, size = 0x4, offset = 0x4, fixed_abs, tag = 'smem constant byte address 0x4 - core index']
  #allocation1 [shape = 'u32[72,128]{1,0:T(1,128)}', space=vmem, size = 0x9000, scoped, tag = 'internal scratch']
  %s0 = inlined_call_operand.vmem [shape: s32[16,1], index: 0, kind: input, shape index: {}]
  %s1 = inlined_call_operand.hbm [shape: f32[32,128], index: 1, kind: input, shape index: {}]
  %s2 = inlined_call_operand.hbm [shape: f32[16,128], index: 2, kind: output, shape index: {}]
  %s3 = sld [smem:[#allocation0]]
  $region22: #{tpu_custom_call.1} parent=0
    _
  %s5 = ssub.s32 1, %s3
  %s6 = scalar_select 0, %s5, %s3
  $region1: #{tpu_custom_call.1} parent=0
    #allocation2 [shape = 'u8[16384]{0}', space=vmem, size = 0x4000, scoped, tag = 'input window, operand 1, single buffered']
    #allocation3 [shape = 's32[1]{0}', space=sflag, size = 0x4, scoped, tag = 'scoped memory for tpu_custom_call.1']
    #allocation4 [shape = 's32[1]{0}', space=sflag, size = 0x4, scoped, tag = 'scoped memory for tpu_custom_call.1']
    #allocation5 [shape = 'u8[8192]{0}', space=vmem, size = 0x2000, scoped, tag = 'output window, operand 0, single buffered']
    %7 = vsyncpa [#allocation3], 0
    %8 = vsyncpa [#allocation4], 0
    // Predicated region
    $region2: #{tpu_custom_call.1} parent=1 // pred_check
      _
    $region3: #{tpu_custom_call.1} parent=1 // pred_check_branch
      %10 = sbr.rel (0) target = $region5
    $region4: #{tpu_custom_call.1} parent=1 // pred_region
      _
    $region5: #{tpu_custom_call.1} parent=1 // pred_fallthru
      _
    // Predicated region
    $region6: #{tpu_custom_call.1} parent=1 // pred_check
      _
    $region7: #{tpu_custom_call.1} parent=1 // pred_check_branch
      %12 = sbr.rel (0) target = $region9
    $region8: #{tpu_custom_call.1} parent=1 // pred_region
      %14 = vsyncadd [#allocation3], 0
      %s15 = sshll.u32 %s1, 4
      %s16 = int_to_ptr.hbm [resolvable:$true] %s15
      %s17 = sshll.u32 [#allocation2], 4
      %s18 = int_to_ptr.vmem [resolvable:$true] %s17
      %23 = dma.hbm_to_vmem [thread:$0]  %s16, 512, %s18, [#allocation3], 128, 128, 8
    $region9: #{tpu_custom_call.1} parent=1 // pred_fallthru
      _
    // Predicated region
    $region10: #{tpu_custom_call.1} parent=1 // pred_check
      _
    $region11: #{tpu_custom_call.1} parent=1 // pred_check_branch
      %25 = sbr.rel (0) target = $region13
    $region12: #{tpu_custom_call.1} parent=1 // pred_region
      %27 = dma.done [#allocation3], 512
    $region13: #{tpu_custom_call.1} parent=1 // pred_fallthru
      _
    %v28 = vld [vmem:[%s0] sm:$0xff]
    %v29 = vld [vmem:[%s0 + $0x8] sm:$0xff]
    %v30 = vlaneseq
    %v31 = vand.u32 %v30, 127
    %32 = vset.pattern.permute.xlu0 0
    %33 = vperm.xlu0 %32, %v28
    %v34 = vpop.permute.xlu0 %33
    %35 = vset.pattern.permute.xlu0 0
    %36 = vperm.xlu0 %35, %v29
    %v37 = vpop.permute.xlu0 %36
    %vm38 = vcmp.eq.s32.totalorder %v34, %v31
    %vm39 = vcmp.eq.s32.totalorder %v37, %v31
    %v40 = vsel %vm38, 1, 0
    %v41 = vsel %vm39, 1, 0
    %v42 = vcvt.s32.f32 %v40
    %v43 = vcvt.s32.f32 %v41
    %v44 = vld [vmem:[#allocation2] sm:$0xff]
    %v45 = vld [vmem:[#allocation2 + $0x8] sm:$0xff]
    %v46 = vld [vmem:[#allocation2 + $0x10] sm:$0xff]
    %v47 = vld [vmem:[#allocation2 + $0x18] sm:$0xff]
    %vm48 = vcmask 261120
    %v50 = vsel %vm48, %v42, 0
    %v53 = vsel %vm48, %v43, 0
    %55 = vmatpush.msra.mxu0 0.0
    %56 = vmatpush.msra.mxu0 0.0
    %57 = vmatpush.msra.mxu0 0.0
    %58 = vmatpush.msra.mxu0 0.0
    %59 = vmatpush.msra.mxu0 0.0
    %60 = vmatpush.msra.mxu0 0.0
    %61 = vmatpush.msra.mxu0 0.0
    %62 = vmatpush.msra.mxu0 0.0
    %63 = vmatpush.msra.mxu0 0.0
    %64 = vmatpush.msra.mxu0 0.0
    %65 = vmatpush.msra.mxu0 0.0
    %66 = vmatpush.msra.mxu0 0.0
    %67 = vmatpush.msra.mxu0 %v47
    %68 = vmatpush.msra.mxu0 %v46
    %69 = vmatpush.msra.mxu0 %v45
    %70 = vmatpush.msra.mxu0 %v44
    %71 = vmatmul.f32.gmra.mxu0 %v50
    %v72 = vpop.f32.mrf.mxu0
    %v73 = vadd.f32 0.0, %v72
    %74 = vmatmul.f32.gmra.mxu0 %v53
    %v75 = vpop.f32.mrf.mxu0
    %v76 = vadd.f32 0.0, %v75
    %77 = vdwg.mxu0
    %v78 = vmul.f32 %v73, 2.0
    %v79 = vmul.f32 %v76, 2.0
    %v80 = vadd.f32 %v78, 1.0
    %v81 = vadd.f32 %v79, 1.0
    %82 = vst [vmem:[#allocation5] sm:$0xff] %v80
    %83 = vst [vmem:[#allocation5 + $0x8] sm:$0xff] %v81
    // Predicated region
    $region14: #{tpu_custom_call.1} parent=1 // pred_check
      _
    $region15: #{tpu_custom_call.1} parent=1 // pred_check_branch
      %85 = sbr.rel (0) target = $region17
    $region16: #{tpu_custom_call.1} parent=1 // pred_region
      %87 = vsyncadd [#allocation4], 0
      %s88 = sshll.u32 [#allocation5], 4
      %s89 = int_to_ptr.vmem [resolvable:$true] %s88
      %s90 = sshll.u32 %s2, 4
      %s91 = int_to_ptr.hbm [resolvable:$true] %s90
      %96 = dma.vmem_to_hbm [thread:$0]  %s89, 256, %s91, [#allocation4], 128, 128, 8
    $region17: #{tpu_custom_call.1} parent=1 // pred_fallthru
      _
    // Predicated region
    $region18: #{tpu_custom_call.1} parent=1 // pred_check
      _
    $region19: #{tpu_custom_call.1} parent=1 // pred_check_branch
      %98 = sbr.rel (0) target = $region21
    $region20: #{tpu_custom_call.1} parent=1 // pred_region
      %100 = dma.done [#allocation4], 256
    $region21: #{tpu_custom_call.1} parent=1 // pred_fallthru
      _
    %101 = vsyncpa [#allocation3], 1
    %102 = vsyncpa [#allocation4], 1

// kernel: tpu_custom_call.1
$region0: #{tpu_custom_call.1}
  #allocation0 [shape = 'u32[]', space=smem, size = 0x4, offset = 0x4, fixed_abs, tag = 'smem constant byte address 0x4 - core index']
  #allocation1 [shape = 'u32[72,128]{1,0:T(1,128)}', space=vmem, size = 0x9000, scoped, tag = 'internal scratch']
  %s0 = inlined_call_operand.vmem [shape: s32[16,1], index: 0, kind: input, shape index: {}]
  %s1 = inlined_call_operand.hbm [shape: f32[32,128], index: 1, kind: input, shape index: {}]
  %s2 = inlined_call_operand.hbm [shape: f32[16,128], index: 2, kind: output, shape index: {}]
  %s3 = sld [smem:[#allocation0]]
  $region22: #{tpu_custom_call.1} parent=0
    _
  %s5 = ssub.s32 1, %s3
  %s6 = scalar_select 0, %s5, %s3
  $region1: #{tpu_custom_call.1} parent=0
    #allocation2 [shape = 'u8[16384]{0}', space=vmem, size = 0x4000, scoped, tag = 'input window, operand 1, single buffered']
    #allocation3 [shape = 's32[1]{0}', space=sflag, size = 0x4, scoped, tag = 'scoped memory for tpu_custom_call.1']
    #allocation4 [shape = 's32[1]{0}', space=sflag, size = 0x4, scoped, tag = 'scoped memory for tpu_custom_call.1']
    #allocation5 [shape = 'u8[8192]{0}', space=vmem, size = 0x2000, scoped, tag = 'output window, operand 0, single buffered']
    %7 = vsyncpa [#allocation3], 0
    %8 = vsyncpa [#allocation4], 0
    // Predicated region
    $region2: #{tpu_custom_call.1} parent=1 // pred_check
      _
    $region3: #{tpu_custom_call.1} parent=1 // pred_check_branch
      %10 = sbr.rel (0) target = $region5
    $region4: #{tpu_custom_call.1} parent=1 // pred_region
      _
    $region5: #{tpu_custom_call.1} parent=1 // pred_fallthru
      _
    // Predicated region
    $region6: #{tpu_custom_call.1} parent=1 // pred_check
      _
    $region7: #{tpu_custom_call.1} parent=1 // pred_check_branch
      %12 = sbr.rel (0) target = $region9
    $region8: #{tpu_custom_call.1} parent=1 // pred_region
      %14 = vsyncadd [#allocation3], 0
      %s15 = sshll.u32 %s1, 4
      %s16 = int_to_ptr.hbm [resolvable:$true] %s15
      %s17 = sshll.u32 [#allocation2], 4
      %s18 = int_to_ptr.vmem [resolvable:$true] %s17
      %23 = dma.hbm_to_vmem [thread:$0]  %s16, 512, %s18, [#allocation3], 128, 128, 8
    $region9: #{tpu_custom_call.1} parent=1 // pred_fallthru
      _
    // Predicated region
    $region10: #{tpu_custom_call.1} parent=1 // pred_check
      _
    $region11: #{tpu_custom_call.1} parent=1 // pred_check_branch
      %25 = sbr.rel (0) target = $region13
    $region12: #{tpu_custom_call.1} parent=1 // pred_region
      %27 = dma.done [#allocation3], 512
    $region13: #{tpu_custom_call.1} parent=1 // pred_fallthru
      _
    %v28 = vld [vmem:[%s0] sm:$0xff]
    %v29 = vld [vmem:[%s0 + $0x8] sm:$0xff]
    %v30 = vlaneseq
    %v31 = vand.u32 %v30, 127
    %32 = vset.pattern.permute.xlu0 0
    %33 = vperm.xlu0 %32, %v28
    %v34 = vpop.permute.xlu0 %33
    %35 = vset.pattern.permute.xlu0 0
    %36 = vperm.xlu0 %35, %v29
    %v37 = vpop.permute.xlu0 %36
    %vm38 = vcmp.eq.s32.totalorder %v34, %v31
    %vm39 = vcmp.eq.s32.totalorder %v37, %v31
    %v40 = vsel %vm38, 1, 0
    %v41 = vsel %vm39, 1, 0
    %v42 = vcvt.s32.f32 %v40
    %v43 = vcvt.s32.f32 %v41
    %v44 = vld [vmem:[#allocation2] sm:$0xff]
    %v45 = vld [vmem:[#allocation2 + $0x8] sm:$0xff]
    %v46 = vld [vmem:[#allocation2 + $0x10] sm:$0xff]
    %v47 = vld [vmem:[#allocation2 + $0x18] sm:$0xff]
    %vm48 = vcmask 261120
    %v50 = vsel %vm48, %v42, 0
    %v53 = vsel %vm48, %v43, 0
    %55 = vmatpush.msra.mxu0 0.0
    %56 = vmatpush.msra.mxu0 0.0
    %57 = vmatpush.msra.mxu0 0.0
    %58 = vmatpush.msra.mxu0 0.0
    %59 = vmatpush.msra.mxu0 0.0
    %60 = vmatpush.msra.mxu0 0.0
    %61 = vmatpush.msra.mxu0 0.0
    %62 = vmatpush.msra.mxu0 0.0
    %63 = vmatpush.msra.mxu0 0.0
    %64 = vmatpush.msra.mxu0 0.0
    %65 = vmatpush.msra.mxu0 0.0
    %66 = vmatpush.msra.mxu0 0.0
    %67 = vmatpush.msra.mxu0 %v47
    %68 = vmatpush.msra.mxu0 %v46
    %69 = vmatpush.msra.mxu0 %v45
    %70 = vmatpush.msra.mxu0 %v44
    %71 = vmatmul.f32.gmra.mxu0 %v50
    %v72 = vpop.f32.mrf.mxu0
    %v73 = vadd.f32 0.0, %v72
    %74 = vmatmul.f32.gmra.mxu0 %v53
    %v75 = vpop.f32.mrf.mxu0
    %v76 = vadd.f32 0.0, %v75
    %77 = vdwg.mxu0
    %v78 = vmul.f32 %v73, 2.0
    %v79 = vmul.f32 %v76, 2.0
    %v80 = vadd.f32 %v78, 1.0
    %v81 = vadd.f32 %v79, 1.0
    %82 = vst [vmem:[#allocation5] sm:$0xff] %v80
    %83 = vst [vmem:[#allocation5 + $0x8] sm:$0xff] %v81
    // Predicated region
    $region14: #{tpu_custom_call.1} parent=1 // pred_check
      _
    $region15: #{tpu_custom_call.1} parent=1 // pred_check_branch
      %85 = sbr.rel (0) target = $region17
    $region16: #{tpu_custom_call.1} parent=1 // pred_region
      %87 = vsyncadd [#allocation4], 0
      %s88 = sshll.u32 [#allocation5], 4
      %s89 = int_to_ptr.vmem [resolvable:$true] %s88
      %s90 = sshll.u32 %s2, 4
      %s91 = int_to_ptr.hbm [resolvable:$true] %s90
      %96 = dma.vmem_to_hbm [thread:$0]  %s89, 256, %s91, [#allocation4], 128, 128, 8
    $region17: #{tpu_custom_call.1} parent=1 // pred_fallthru
      _
    // Predicated region
    $region18: #{tpu_custom_call.1} parent=1 // pred_check
      _
    $region19: #{tpu_custom_call.1} parent=1 // pred_check_branch
      %98 = sbr.rel (0) target = $region21
    $region20: #{tpu_custom_call.1} parent=1 // pred_region
      %100 = dma.done [#allocation4], 256
    $region21: #{tpu_custom_call.1} parent=1 // pred_fallthru
      _
    %101 = vsyncpa [#allocation3], 1
    %102 = vsyncpa [#allocation4], 1

</llo_original>
